<compile_context>
chip_gen: v6e
topology: v6e:2x2x1
jax: 0.10.0
libtpu: 0.0.40
codegen_flags: <defaults>
</compile_context>

<pallas_src>
import jax
import jax.numpy as jnp
from jax import lax
from jax.experimental import pallas as pl
from jax.experimental.pallas import tpu as pltpu

# ---- model hyper-parameters (small, consistent with the module's forward) ----
VOCAB_SIZE = 100
VOCAB_PADDED = 128      # Vp — pad vocab rows so counts@embed is lane/MXU friendly
EMBEDDING_DIM = 32      # hidden size H
NUM_CLASSES = 4         # C (real classes)
CLASSES_PADDED = 128    # CP — lane-dense output width (sliced back to C outside)
BATCH = 2               # B
SEQ = 8                 # S

TB = BATCH              # batch tile; for larger B use a multiple of 8 so the
                        # output block stays (8,128)-aligned across the grid.


def textmodel_kernel(ids_ref, mask_ref, embed_ref, wp_ref, o_ref):
    """Fused one-hot backbone lookup + masked mean pooling + lane-dense fc.

    ids_ref:    [B, S]   int32  (SMEM, scalar-prefetched token ids)
    mask_ref:   [B, S]   int32  (SMEM, scalar-prefetched attention mask)
    embed_ref:  [Vp, H]  f32    (VMEM, synthetic backbone table, zero-padded rows)
    wp_ref:     [H, CP]  f32    (VMEM, fc weight transposed + zero-padded to CP)
    o_ref:      [TB, CP] f32    (VMEM, lane-dense padded logits; real = [:, :C])
    """
    bt = pl.program_id(0)
    Vp = embed_ref.shape[0]
    S = ids_ref.shape[1]
    TBk = o_ref.shape[0]

    lane_v = lax.broadcasted_iota(jnp.int32, (TBk, Vp), 1)   # vocab id per lane
    row_i = lax.broadcasted_iota(jnp.int32, (TBk, Vp), 0)    # tile row per sublane

    # counts[i, v] = sum_s mask[b, s] * (ids[b, s] == v)   (built with VPU splats)
    counts = jnp.zeros((TBk, Vp), jnp.float32)
    for i in range(TBk):                       # static unroll over the batch tile
        b = bt * TBk + i                       # global row into SMEM ids/mask
        sel_i = row_i == i
        for s in range(S):                     # static unroll over the sequence
            tok = ids_ref[b, s]                              # scalar from SMEM
            m = mask_ref[b, s].astype(jnp.float32)           # scalar from SMEM
            hit = jnp.logical_and(sel_i, lane_v == tok)
            counts = counts + jnp.where(hit, m, 0.0)

    # Masked sum-pool on the MXU:  sum_s mask*h  ==  counts @ embed.
    summed = jnp.dot(counts, embed_ref[...],
                     preferred_element_type=jnp.float32)      # [TB, H]
    # sum_mask per row falls out of counts for free (lane reduce).
    cnt = jnp.sum(counts, axis=1, keepdims=True)              # [TB, 1]
    pooled = summed / jnp.maximum(cnt, 1e-9)                  # clamp(1e-9) as in ref

    # Dropout(p=0.2) is identity in eval mode.
    # TODO(synk): training-mode dropout (stateful PRNG mask) not implemented.

    # fc on the MXU with a lane-dense CP=128 output; bias folded in the wrapper.
    o_ref[...] = jnp.dot(pooled, wp_ref[...],
                         preferred_element_type=jnp.float32)


def text_model(ids, mask, params):
    """Full forward: fused synthetic backbone + pooling + fc in one kernel."""
    B, S = ids.shape
    Vp, H = params["embed_padded"].shape
    CP = params["fc_w_padded"].shape[1]
    assert B % TB == 0

    padded_logits = pl.pallas_call(
        textmodel_kernel,
        out_shape=jax.ShapeDtypeStruct((B, CP), jnp.float32),
        grid_spec=pltpu.PrefetchScalarGridSpec(
            num_scalar_prefetch=2,               # ids, mask -> SMEM
            grid=(B // TB,),
            in_specs=[
                pl.BlockSpec((Vp, H), lambda bt, ids_r, mask_r: (0, 0)),
                pl.BlockSpec((H, CP), lambda bt, ids_r, mask_r: (0, 0)),
            ],
            out_specs=pl.BlockSpec((TB, CP), lambda bt, ids_r, mask_r: (bt, 0)),
        ),
        compiler_params=pltpu.CompilerParams(
            dimension_semantics=("parallel",)),
    )(ids.astype(jnp.int32), mask.astype(jnp.int32),
      params["embed_padded"], params["fc_w_padded"])

    # Slice padded lanes back to the real class count; bias add folded here
    # (avoids a [1, C] VMEM operand that would pad to a full (8,128) tile).
    return padded_logits[:, :NUM_CLASSES] + params["fc_b"]


def init_params(key):
    k_emb, k_w, k_b = jax.random.split(key, 3)
    # TODO(synk): pretrained BERT encoder has no in-script Pallas equivalent;
    # replaced with a deterministic embedding-table lookup as the backbone.
    embed = jax.random.normal(k_emb, (VOCAB_SIZE, EMBEDDING_DIM), jnp.float32) * 0.02
    # nn.Linear(EMBEDDING_DIM, NUM_CLASSES): weight [C, H], bias [1, C].
    fc_w = jax.random.normal(k_w, (NUM_CLASSES, EMBEDDING_DIM), jnp.float32) * 0.02
    fc_b = jax.random.normal(k_b, (1, NUM_CLASSES), jnp.float32) * 0.02
    # Zero-pad vocab rows to Vp=128 (padded rows are never hit and contribute 0).
    embed_padded = jnp.zeros((VOCAB_PADDED, EMBEDDING_DIM), jnp.float32)
    embed_padded = embed_padded.at[:VOCAB_SIZE].set(embed)
    # Pre-transpose + zero-pad the weight to CP=128 output lanes (lane-dense fc).
    fc_w_padded = jnp.zeros((EMBEDDING_DIM, CLASSES_PADDED), jnp.float32)
    fc_w_padded = fc_w_padded.at[:, :NUM_CLASSES].set(fc_w.T)
    return {"embed": embed, "embed_padded": embed_padded,
            "fc_w": fc_w, "fc_b": fc_b, "fc_w_padded": fc_w_padded}


if __name__ == "__main__":
    key = jax.random.PRNGKey(0)
    k_params, k_ids = jax.random.split(key, 2)

    params = init_params(k_params)

    ids = jax.random.randint(k_ids, (BATCH, SEQ), 0, VOCAB_SIZE, dtype=jnp.int32)
    # Deterministic attention mask: valid lengths per example.
    lengths = jnp.array([SEQ, SEQ - 3], dtype=jnp.int32)
    mask = (jnp.arange(SEQ)[None, :] < lengths[:, None]).astype(jnp.int32)  # [B, S]

    out = text_model(ids, mask, params)
    out = jax.block_until_ready(out)

    # Reference check in plain JAX (mirrors the PyTorch forward semantics).
    h = jnp.take(params["embed"], ids, axis=0)                 # last_hidden_state
    m = mask.astype(jnp.float32)[:, :, None]
    ref_mean = jnp.sum(h * m, axis=1) / jnp.maximum(jnp.sum(m, axis=1), 1e-9)
    ref = ref_mean @ params["fc_w"].T + params["fc_b"]

    assert out.shape == (BATCH, NUM_CLASSES)
    assert jnp.allclose(out, ref, atol=1e-5, rtol=1e-5)

    print("KERNEL_OK")
</pallas_src>

<mosaic_0001>
module attributes {stable_mosaic.version = 11 : i64} {
  func.func @textmodel_kernel(%arg0: i32, %arg1: memref<2x8xi32, #tpu.memory_space<smem>>, %arg2: memref<2x8xi32, #tpu.memory_space<smem>>, %arg3: memref<128x32xf32, #tpu.memory_space<vmem>>, %arg4: memref<32x128xf32, #tpu.memory_space<vmem>>, %arg5: memref<2x128xf32, #tpu.memory_space<vmem>>) attributes {dimension_semantics = [#tpu.dimension_semantics<parallel>], iteration_bounds = array<i64: 1>, scalar_prefetch = 2 : i64, scratch_operands = 0 : i64, tpu.core_type = #tpu.core_type<tc>, window_params = [{pipeline_mode = #tpu.pipeline_mode<synchronous>, transform_indices = @transform_0, window_bounds = array<i64: 128, 32>}, {pipeline_mode = #tpu.pipeline_mode<synchronous>, transform_indices = @transform_1, window_bounds = array<i64: 32, 128>}, {transform_indices = @transform_2, window_bounds = array<i64: 2, 128>}]} {
    %0 = tpu.iota {dimensions = array<i32: 1>} : vector<2x128xi32>
    %1 = tpu.iota {dimensions = array<i32: 0>} : vector<2x128xi32>
    %cst = arith.constant 0.000000e+00 : f32
    %2 = vector.broadcast %cst : f32 to vector<2x128xf32>
    %c2_i32 = arith.constant 2 : i32
    %3 = arith.muli %arg0, %c2_i32 : i32
    %c0_i32 = arith.constant 0 : i32
    %4 = arith.addi %3, %c0_i32 : i32
    %c0_i32_0 = arith.constant 0 : i32
    %5 = vector.broadcast %c0_i32_0 : i32 to vector<2x128xi32>
    %6 = arith.cmpi eq, %1, %5 : vector<2x128xi32>
    %7 = arith.index_cast %4 : i32 to index
    %c0 = arith.constant 0 : index
    %8 = memref.load %arg1[%7, %c0] : memref<2x8xi32, #tpu.memory_space<smem>>
    %9 = arith.index_cast %4 : i32 to index
    %c0_1 = arith.constant 0 : index
    %10 = memref.load %arg2[%9, %c0_1] : memref<2x8xi32, #tpu.memory_space<smem>>
    %11 = arith.sitofp %10 : i32 to f32
    %12 = vector.broadcast %8 : i32 to vector<2x128xi32>
    %13 = arith.cmpi eq, %0, %12 : vector<2x128xi32>
    %14 = arith.andi %6, %13 : vector<2x128xi1>
    %cst_2 = arith.constant 0.000000e+00 : f32
    %15 = vector.broadcast %11 : f32 to vector<2x128xf32>
    %16 = vector.broadcast %cst_2 : f32 to vector<2x128xf32>
    %17 = arith.select %14, %15, %16 : vector<2x128xi1>, vector<2x128xf32>
    %18 = arith.addf %2, %17 : vector<2x128xf32>
    %19 = arith.index_cast %4 : i32 to index
    %c1 = arith.constant 1 : index
    %20 = memref.load %arg1[%19, %c1] : memref<2x8xi32, #tpu.memory_space<smem>>
    %21 = arith.index_cast %4 : i32 to index
    %c1_3 = arith.constant 1 : index
    %22 = memref.load %arg2[%21, %c1_3] : memref<2x8xi32, #tpu.memory_space<smem>>
    %23 = arith.sitofp %22 : i32 to f32
    %24 = vector.broadcast %20 : i32 to vector<2x128xi32>
    %25 = arith.cmpi eq, %0, %24 : vector<2x128xi32>
    %26 = arith.andi %6, %25 : vector<2x128xi1>
    %cst_4 = arith.constant 0.000000e+00 : f32
    %27 = vector.broadcast %23 : f32 to vector<2x128xf32>
    %28 = vector.broadcast %cst_4 : f32 to vector<2x128xf32>
    %29 = arith.select %26, %27, %28 : vector<2x128xi1>, vector<2x128xf32>
    %30 = arith.addf %18, %29 : vector<2x128xf32>
    %31 = arith.index_cast %4 : i32 to index
    %c2 = arith.constant 2 : index
    %32 = memref.load %arg1[%31, %c2] : memref<2x8xi32, #tpu.memory_space<smem>>
    %33 = arith.index_cast %4 : i32 to index
    %c2_5 = arith.constant 2 : index
    %34 = memref.load %arg2[%33, %c2_5] : memref<2x8xi32, #tpu.memory_space<smem>>
    %35 = arith.sitofp %34 : i32 to f32
    %36 = vector.broadcast %32 : i32 to vector<2x128xi32>
    %37 = arith.cmpi eq, %0, %36 : vector<2x128xi32>
    %38 = arith.andi %6, %37 : vector<2x128xi1>
    %cst_6 = arith.constant 0.000000e+00 : f32
    %39 = vector.broadcast %35 : f32 to vector<2x128xf32>
    %40 = vector.broadcast %cst_6 : f32 to vector<2x128xf32>
    %41 = arith.select %38, %39, %40 : vector<2x128xi1>, vector<2x128xf32>
    %42 = arith.addf %30, %41 : vector<2x128xf32>
    %43 = arith.index_cast %4 : i32 to index
    %c3 = arith.constant 3 : index
    %44 = memref.load %arg1[%43, %c3] : memref<2x8xi32, #tpu.memory_space<smem>>
    %45 = arith.index_cast %4 : i32 to index
    %c3_7 = arith.constant 3 : index
    %46 = memref.load %arg2[%45, %c3_7] : memref<2x8xi32, #tpu.memory_space<smem>>
    %47 = arith.sitofp %46 : i32 to f32
    %48 = vector.broadcast %44 : i32 to vector<2x128xi32>
    %49 = arith.cmpi eq, %0, %48 : vector<2x128xi32>
    %50 = arith.andi %6, %49 : vector<2x128xi1>
    %cst_8 = arith.constant 0.000000e+00 : f32
    %51 = vector.broadcast %47 : f32 to vector<2x128xf32>
    %52 = vector.broadcast %cst_8 : f32 to vector<2x128xf32>
    %53 = arith.select %50, %51, %52 : vector<2x128xi1>, vector<2x128xf32>
    %54 = arith.addf %42, %53 : vector<2x128xf32>
    %55 = arith.index_cast %4 : i32 to index
    %c4 = arith.constant 4 : index
    %56 = memref.load %arg1[%55, %c4] : memref<2x8xi32, #tpu.memory_space<smem>>
    %57 = arith.index_cast %4 : i32 to index
    %c4_9 = arith.constant 4 : index
    %58 = memref.load %arg2[%57, %c4_9] : memref<2x8xi32, #tpu.memory_space<smem>>
    %59 = arith.sitofp %58 : i32 to f32
    %60 = vector.broadcast %56 : i32 to vector<2x128xi32>
    %61 = arith.cmpi eq, %0, %60 : vector<2x128xi32>
    %62 = arith.andi %6, %61 : vector<2x128xi1>
    %cst_10 = arith.constant 0.000000e+00 : f32
    %63 = vector.broadcast %59 : f32 to vector<2x128xf32>
    %64 = vector.broadcast %cst_10 : f32 to vector<2x128xf32>
    %65 = arith.select %62, %63, %64 : vector<2x128xi1>, vector<2x128xf32>
    %66 = arith.addf %54, %65 : vector<2x128xf32>
    %67 = arith.index_cast %4 : i32 to index
    %c5 = arith.constant 5 : index
    %68 = memref.load %arg1[%67, %c5] : memref<2x8xi32, #tpu.memory_space<smem>>
    %69 = arith.index_cast %4 : i32 to index
    %c5_11 = arith.constant 5 : index
    %70 = memref.load %arg2[%69, %c5_11] : memref<2x8xi32, #tpu.memory_space<smem>>
    %71 = arith.sitofp %70 : i32 to f32
    %72 = vector.broadcast %68 : i32 to vector<2x128xi32>
    %73 = arith.cmpi eq, %0, %72 : vector<2x128xi32>
    %74 = arith.andi %6, %73 : vector<2x128xi1>
    %cst_12 = arith.constant 0.000000e+00 : f32
    %75 = vector.broadcast %71 : f32 to vector<2x128xf32>
    %76 = vector.broadcast %cst_12 : f32 to vector<2x128xf32>
    %77 = arith.select %74, %75, %76 : vector<2x128xi1>, vector<2x128xf32>
    %78 = arith.addf %66, %77 : vector<2x128xf32>
    %79 = arith.index_cast %4 : i32 to index
    %c6 = arith.constant 6 : index
    %80 = memref.load %arg1[%79, %c6] : memref<2x8xi32, #tpu.memory_space<smem>>
    %81 = arith.index_cast %4 : i32 to index
    %c6_13 = arith.constant 6 : index
    %82 = memref.load %arg2[%81, %c6_13] : memref<2x8xi32, #tpu.memory_space<smem>>
    %83 = arith.sitofp %82 : i32 to f32
    %84 = vector.broadcast %80 : i32 to vector<2x128xi32>
    %85 = arith.cmpi eq, %0, %84 : vector<2x128xi32>
    %86 = arith.andi %6, %85 : vector<2x128xi1>
    %cst_14 = arith.constant 0.000000e+00 : f32
    %87 = vector.broadcast %83 : f32 to vector<2x128xf32>
    %88 = vector.broadcast %cst_14 : f32 to vector<2x128xf32>
    %89 = arith.select %86, %87, %88 : vector<2x128xi1>, vector<2x128xf32>
    %90 = arith.addf %78, %89 : vector<2x128xf32>
    %91 = arith.index_cast %4 : i32 to index
    %c7 = arith.constant 7 : index
    %92 = memref.load %arg1[%91, %c7] : memref<2x8xi32, #tpu.memory_space<smem>>
    %93 = arith.index_cast %4 : i32 to index
    %c7_15 = arith.constant 7 : index
    %94 = memref.load %arg2[%93, %c7_15] : memref<2x8xi32, #tpu.memory_space<smem>>
    %95 = arith.sitofp %94 : i32 to f32
    %96 = vector.broadcast %92 : i32 to vector<2x128xi32>
    %97 = arith.cmpi eq, %0, %96 : vector<2x128xi32>
    %98 = arith.andi %6, %97 : vector<2x128xi1>
    %cst_16 = arith.constant 0.000000e+00 : f32
    %99 = vector.broadcast %95 : f32 to vector<2x128xf32>
    %100 = vector.broadcast %cst_16 : f32 to vector<2x128xf32>
    %101 = arith.select %98, %99, %100 : vector<2x128xi1>, vector<2x128xf32>
    %102 = arith.addf %90, %101 : vector<2x128xf32>
    %c2_i32_17 = arith.constant 2 : i32
    %103 = arith.muli %arg0, %c2_i32_17 : i32
    %c1_i32 = arith.constant 1 : i32
    %104 = arith.addi %103, %c1_i32 : i32
    %c1_i32_18 = arith.constant 1 : i32
    %105 = vector.broadcast %c1_i32_18 : i32 to vector<2x128xi32>
    %106 = arith.cmpi eq, %1, %105 : vector<2x128xi32>
    %107 = arith.index_cast %104 : i32 to index
    %c0_19 = arith.constant 0 : index
    %108 = memref.load %arg1[%107, %c0_19] : memref<2x8xi32, #tpu.memory_space<smem>>
    %109 = arith.index_cast %104 : i32 to index
    %c0_20 = arith.constant 0 : index
    %110 = memref.load %arg2[%109, %c0_20] : memref<2x8xi32, #tpu.memory_space<smem>>
    %111 = arith.sitofp %110 : i32 to f32
    %112 = vector.broadcast %108 : i32 to vector<2x128xi32>
    %113 = arith.cmpi eq, %0, %112 : vector<2x128xi32>
    %114 = arith.andi %106, %113 : vector<2x128xi1>
    %cst_21 = arith.constant 0.000000e+00 : f32
    %115 = vector.broadcast %111 : f32 to vector<2x128xf32>
    %116 = vector.broadcast %cst_21 : f32 to vector<2x128xf32>
    %117 = arith.select %114, %115, %116 : vector<2x128xi1>, vector<2x128xf32>
    %118 = arith.addf %102, %117 : vector<2x128xf32>
    %119 = arith.index_cast %104 : i32 to index
    %c1_22 = arith.constant 1 : index
    %120 = memref.load %arg1[%119, %c1_22] : memref<2x8xi32, #tpu.memory_space<smem>>
    %121 = arith.index_cast %104 : i32 to index
    %c1_23 = arith.constant 1 : index
    %122 = memref.load %arg2[%121, %c1_23] : memref<2x8xi32, #tpu.memory_space<smem>>
    %123 = arith.sitofp %122 : i32 to f32
    %124 = vector.broadcast %120 : i32 to vector<2x128xi32>
    %125 = arith.cmpi eq, %0, %124 : vector<2x128xi32>
    %126 = arith.andi %106, %125 : vector<2x128xi1>
    %cst_24 = arith.constant 0.000000e+00 : f32
    %127 = vector.broadcast %123 : f32 to vector<2x128xf32>
    %128 = vector.broadcast %cst_24 : f32 to vector<2x128xf32>
    %129 = arith.select %126, %127, %128 : vector<2x128xi1>, vector<2x128xf32>
    %130 = arith.addf %118, %129 : vector<2x128xf32>
    %131 = arith.index_cast %104 : i32 to index
    %c2_25 = arith.constant 2 : index
    %132 = memref.load %arg1[%131, %c2_25] : memref<2x8xi32, #tpu.memory_space<smem>>
    %133 = arith.index_cast %104 : i32 to index
    %c2_26 = arith.constant 2 : index
    %134 = memref.load %arg2[%133, %c2_26] : memref<2x8xi32, #tpu.memory_space<smem>>
    %135 = arith.sitofp %134 : i32 to f32
    %136 = vector.broadcast %132 : i32 to vector<2x128xi32>
    %137 = arith.cmpi eq, %0, %136 : vector<2x128xi32>
    %138 = arith.andi %106, %137 : vector<2x128xi1>
    %cst_27 = arith.constant 0.000000e+00 : f32
    %139 = vector.broadcast %135 : f32 to vector<2x128xf32>
    %140 = vector.broadcast %cst_27 : f32 to vector<2x128xf32>
    %141 = arith.select %138, %139, %140 : vector<2x128xi1>, vector<2x128xf32>
    %142 = arith.addf %130, %141 : vector<2x128xf32>
    %143 = arith.index_cast %104 : i32 to index
    %c3_28 = arith.constant 3 : index
    %144 = memref.load %arg1[%143, %c3_28] : memref<2x8xi32, #tpu.memory_space<smem>>
    %145 = arith.index_cast %104 : i32 to index
    %c3_29 = arith.constant 3 : index
    %146 = memref.load %arg2[%145, %c3_29] : memref<2x8xi32, #tpu.memory_space<smem>>
    %147 = arith.sitofp %146 : i32 to f32
    %148 = vector.broadcast %144 : i32 to vector<2x128xi32>
    %149 = arith.cmpi eq, %0, %148 : vector<2x128xi32>
    %150 = arith.andi %106, %149 : vector<2x128xi1>
    %cst_30 = arith.constant 0.000000e+00 : f32
    %151 = vector.broadcast %147 : f32 to vector<2x128xf32>
    %152 = vector.broadcast %cst_30 : f32 to vector<2x128xf32>
    %153 = arith.select %150, %151, %152 : vector<2x128xi1>, vector<2x128xf32>
    %154 = arith.addf %142, %153 : vector<2x128xf32>
    %155 = arith.index_cast %104 : i32 to index
    %c4_31 = arith.constant 4 : index
    %156 = memref.load %arg1[%155, %c4_31] : memref<2x8xi32, #tpu.memory_space<smem>>
    %157 = arith.index_cast %104 : i32 to index
    %c4_32 = arith.constant 4 : index
    %158 = memref.load %arg2[%157, %c4_32] : memref<2x8xi32, #tpu.memory_space<smem>>
    %159 = arith.sitofp %158 : i32 to f32
    %160 = vector.broadcast %156 : i32 to vector<2x128xi32>
    %161 = arith.cmpi eq, %0, %160 : vector<2x128xi32>
    %162 = arith.andi %106, %161 : vector<2x128xi1>
    %cst_33 = arith.constant 0.000000e+00 : f32
    %163 = vector.broadcast %159 : f32 to vector<2x128xf32>
    %164 = vector.broadcast %cst_33 : f32 to vector<2x128xf32>
    %165 = arith.select %162, %163, %164 : vector<2x128xi1>, vector<2x128xf32>
    %166 = arith.addf %154, %165 : vector<2x128xf32>
    %167 = arith.index_cast %104 : i32 to index
    %c5_34 = arith.constant 5 : index
    %168 = memref.load %arg1[%167, %c5_34] : memref<2x8xi32, #tpu.memory_space<smem>>
    %169 = arith.index_cast %104 : i32 to index
    %c5_35 = arith.constant 5 : index
    %170 = memref.load %arg2[%169, %c5_35] : memref<2x8xi32, #tpu.memory_space<smem>>
    %171 = arith.sitofp %170 : i32 to f32
    %172 = vector.broadcast %168 : i32 to vector<2x128xi32>
    %173 = arith.cmpi eq, %0, %172 : vector<2x128xi32>
    %174 = arith.andi %106, %173 : vector<2x128xi1>
    %cst_36 = arith.constant 0.000000e+00 : f32
    %175 = vector.broadcast %171 : f32 to vector<2x128xf32>
    %176 = vector.broadcast %cst_36 : f32 to vector<2x128xf32>
    %177 = arith.select %174, %175, %176 : vector<2x128xi1>, vector<2x128xf32>
    %178 = arith.addf %166, %177 : vector<2x128xf32>
    %179 = arith.index_cast %104 : i32 to index
    %c6_37 = arith.constant 6 : index
    %180 = memref.load %arg1[%179, %c6_37] : memref<2x8xi32, #tpu.memory_space<smem>>
    %181 = arith.index_cast %104 : i32 to index
    %c6_38 = arith.constant 6 : index
    %182 = memref.load %arg2[%181, %c6_38] : memref<2x8xi32, #tpu.memory_space<smem>>
    %183 = arith.sitofp %182 : i32 to f32
    %184 = vector.broadcast %180 : i32 to vector<2x128xi32>
    %185 = arith.cmpi eq, %0, %184 : vector<2x128xi32>
    %186 = arith.andi %106, %185 : vector<2x128xi1>
    %cst_39 = arith.constant 0.000000e+00 : f32
    %187 = vector.broadcast %183 : f32 to vector<2x128xf32>
    %188 = vector.broadcast %cst_39 : f32 to vector<2x128xf32>
    %189 = arith.select %186, %187, %188 : vector<2x128xi1>, vector<2x128xf32>
    %190 = arith.addf %178, %189 : vector<2x128xf32>
    %191 = arith.index_cast %104 : i32 to index
    %c7_40 = arith.constant 7 : index
    %192 = memref.load %arg1[%191, %c7_40] : memref<2x8xi32, #tpu.memory_space<smem>>
    %193 = arith.index_cast %104 : i32 to index
    %c7_41 = arith.constant 7 : index
    %194 = memref.load %arg2[%193, %c7_41] : memref<2x8xi32, #tpu.memory_space<smem>>
    %195 = arith.sitofp %194 : i32 to f32
    %196 = vector.broadcast %192 : i32 to vector<2x128xi32>
    %197 = arith.cmpi eq, %0, %196 : vector<2x128xi32>
    %198 = arith.andi %106, %197 : vector<2x128xi1>
    %cst_42 = arith.constant 0.000000e+00 : f32
    %199 = vector.broadcast %195 : f32 to vector<2x128xf32>
    %200 = vector.broadcast %cst_42 : f32 to vector<2x128xf32>
    %201 = arith.select %198, %199, %200 : vector<2x128xi1>, vector<2x128xf32>
    %202 = arith.addf %190, %201 : vector<2x128xf32>
    %c0_43 = arith.constant 0 : index
    %c0_44 = arith.constant 0 : index
    %203 = vector.load %arg3[%c0_43, %c0_44] : memref<128x32xf32, #tpu.memory_space<vmem>>, vector<128x32xf32>
    %cst_45 = arith.constant dense<0.000000e+00> : vector<2x32xf32>
    %204 = tpu.matmul %202, %203, %cst_45 {dimension_numbers = #tpu.dot_dimension_numbers<[1], [0], [0], [1], [0, 0, 1, 1], [], []>} : vector<2x128xf32>, vector<128x32xf32>, vector<2x32xf32> -> vector<2x32xf32>
    %cst_46 = arith.constant dense<0.000000e+00> : vector<2xf32>
    %205 = vector.multi_reduction <add>, %202, %cst_46 [1] : vector<2x128xf32> to vector<2xf32>
    %206 = vector.shape_cast %205 : vector<2xf32> to vector<2x1xf32>
    %cst_47 = arith.constant 9.99999971E-10 : f32
    %207 = vector.broadcast %cst_47 : f32 to vector<2x1xf32>
    %208 = arith.maximumf %206, %207 : vector<2x1xf32>
    %209 = vector.broadcast %208 : vector<2x1xf32> to vector<2x32xf32>
    %210 = arith.divf %204, %209 : vector<2x32xf32>
    %c0_48 = arith.constant 0 : index
    %c0_49 = arith.constant 0 : index
    %211 = vector.load %arg4[%c0_48, %c0_49] : memref<32x128xf32, #tpu.memory_space<vmem>>, vector<32x128xf32>
    %cst_50 = arith.constant dense<0.000000e+00> : vector<2x128xf32>
    %212 = tpu.matmul %210, %211, %cst_50 {dimension_numbers = #tpu.dot_dimension_numbers<[1], [0], [0], [1], [0, 0, 1, 1], [], []>} : vector<2x32xf32>, vector<32x128xf32>, vector<2x128xf32> -> vector<2x128xf32>
    %c0_51 = arith.constant 0 : index
    %c0_52 = arith.constant 0 : index
    %213 = vector.load %arg5[%c0_51, %c0_52] : memref<2x128xf32, #tpu.memory_space<vmem>>, vector<2x128xf32>
    tpu.vector_store %arg5[%c0_51, %c0_52], %212 {strides = array<i32>} : memref<2x128xf32, #tpu.memory_space<vmem>>, vector<2x128xf32>,
    return
  }
  func.func @transform_0(%arg0: i32, %arg1: memref<2x8xi32, #tpu.memory_space<smem>>, %arg2: memref<2x8xi32, #tpu.memory_space<smem>>) -> (i32, i32) {
    %c0_i32 = arith.constant 0 : i32
    %c0_i32_0 = arith.constant 0 : i32
    %c0_i32_1 = arith.constant 0 : i32
    return %c0_i32, %c0_i32_0 : i32, i32
  }
  func.func @transform_1(%arg0: i32, %arg1: memref<2x8xi32, #tpu.memory_space<smem>>, %arg2: memref<2x8xi32, #tpu.memory_space<smem>>) -> (i32, i32) {
    %c0_i32 = arith.constant 0 : i32
    %c0_i32_0 = arith.constant 0 : i32
    %c0_i32_1 = arith.constant 0 : i32
    return %c0_i32, %c0_i32_0 : i32, i32
  }
  func.func @transform_2(%arg0: i32, %arg1: memref<2x8xi32, #tpu.memory_space<smem>>, %arg2: memref<2x8xi32, #tpu.memory_space<smem>>) -> (i32, i32) {
    %c0_i32 = arith.constant 0 : i32
    %c0_i32_0 = arith.constant 0 : i32
    return %arg0, %c0_i32 : i32, i32
  }
}

</mosaic_0001>

<llo_original>
// kernel: tpu_custom_call.1
$region0: #{tpu_custom_call.1}
  #allocation0 [shape = 'u32[]', space=smem, size = 0x4, offset = 0x4, fixed_abs, tag = 'smem constant byte address 0x4 - core index']
  #allocation1 [shape = 'u32[144,128]{1,0:T(1,128)}', space=vmem, size = 0x12000, scoped, tag = 'internal scratch']
  #allocation2 [shape = 's32[1]{0}', space=sflag, size = 0x4, scoped, tag = 'scoped memory for tpu_custom_call.1']
  #allocation3 [shape = 'u8[1024]{0}', space=smem, size = 0x400, scoped, tag = 'prefetched SMEM operand 0']
  #allocation4 [shape = 'u8[1024]{0}', space=smem, size = 0x400, scoped, tag = 'prefetched SMEM operand 1']
  %s0 = inlined_call_operand.vmem [shape: s32[2,8], index: 0, kind: input, shape index: {}]
  %s1 = inlined_call_operand.vmem [shape: s32[2,8], index: 1, kind: input, shape index: {}]
  %s2 = inlined_call_operand.vmem [shape: f32[128,32], index: 2, kind: input, shape index: {}]
  %s3 = inlined_call_operand.vmem [shape: f32[32,128], index: 3, kind: input, shape index: {}]
  %s4 = inlined_call_operand.hbm [shape: f32[2,128], index: 4, kind: output, shape index: {}]
  %s5 = sld [smem:[#allocation0]]
  $region18: #{tpu_custom_call.1} parent=0
    _
  %s7 = ssub.s32 1, %s5
  %s8 = scalar_select 0, %s7, %s5
  %s9 = sshll.u32 %s0, 4
  %s10 = int_to_ptr.vmem [resolvable:$true] %s9
  %12 = dma.vmem_to_smem %s10, 32, [#allocation3], [#allocation2]
  %s13 = sshll.u32 %s1, 4
  %s14 = int_to_ptr.vmem [resolvable:$true] %s13
  %16 = dma.vmem_to_smem %s14, 32, [#allocation4], [#allocation2]
  %17 = dma.done [#allocation2], 64
  %18 = sfence
  $region1: #{tpu_custom_call.1} parent=0
    #allocation5 [shape = 'u8[1024]{0}', space=vmem, size = 0x400, scoped, tag = 'output window, operand 0, single buffered']
    #allocation6 [shape = 's32[1]{0}', space=sflag, size = 0x4, scoped, tag = 'scoped memory for tpu_custom_call.1']
    %19 = vsyncpa [#allocation6], 0
    // Predicated region
    $region2: #{tpu_custom_call.1} parent=1 // pred_check
      _
    $region3: #{tpu_custom_call.1} parent=1 // pred_check_branch
      %21 = sbr.rel (0) target = $region5
    $region4: #{tpu_custom_call.1} parent=1 // pred_region
      _
    $region5: #{tpu_custom_call.1} parent=1 // pred_fallthru
      _
    // Predicated region
    $region6: #{tpu_custom_call.1} parent=1 // pred_check
      _
    $region7: #{tpu_custom_call.1} parent=1 // pred_check_branch
      %23 = sbr.rel (0) target = $region9
    $region8: #{tpu_custom_call.1} parent=1 // pred_region
      _
    $region9: #{tpu_custom_call.1} parent=1 // pred_fallthru
      _
    %v24 = vlaneseq
    %v25 = vand.u32 %v24, 127
    %v26 = vlaneseq
    %v27 = vshrl.u32 %v26, 7
    %s28 = smul.u32 0, 2
    %vm29 = vcmp.eq.s32.totalorder %v27, 0
    %s30 = smul.u32 %s28, 128
    %s31 = sld [smem:[#allocation3 + %s30]]
    %s32 = sld [smem:[#allocation4 + %s30]]
    %s33 = scvt.s32.f32 %s32
    %v34 = vstv %s31
    %vm35 = vcmp.eq.s32.totalorder %v25, %v34
    %vm36 = vmand %vm29, %vm35
    %v37 = vstv %s33
    %v38 = vsel %vm36, %v37, 0.0
    %v39 = vadd.f32 %v38, 0.0
    %s40 = sadd.s32 %s30, 1
    %s41 = sld [smem:[#allocation3 + %s40]]
    %s42 = sld [smem:[#allocation4 + %s40]]
    %s43 = scvt.s32.f32 %s42
    %v44 = vstv %s41
    %vm45 = vcmp.eq.s32.totalorder %v25, %v44
    %vm46 = vmand %vm29, %vm45
    %v47 = vstv %s43
    %v48 = vsel %vm46, %v47, 0.0
    %v49 = vadd.f32 %v39, %v48
    %s50 = sadd.s32 %s30, 2
    %s51 = sld [smem:[#allocation3 + %s50]]
    %s52 = sld [smem:[#allocation4 + %s50]]
    %s53 = scvt.s32.f32 %s52
    %v54 = vstv %s51
    %vm55 = vcmp.eq.s32.totalorder %v25, %v54
    %vm56 = vmand %vm29, %vm55
    %v57 = vstv %s53
    %v58 = vsel %vm56, %v57, 0.0
    %v59 = vadd.f32 %v49, %v58
    %s60 = sadd.s32 %s30, 3
    %s61 = sld [smem:[#allocation3 + %s60]]
    %s62 = sld [smem:[#allocation4 + %s60]]
    %s63 = scvt.s32.f32 %s62
    %v64 = vstv %s61
    %vm65 = vcmp.eq.s32.totalorder %v25, %v64
    %vm66 = vmand %vm29, %vm65
    %v67 = vstv %s63
    %v68 = vsel %vm66, %v67, 0.0
    %v69 = vadd.f32 %v59, %v68
    %s70 = sadd.s32 %s30, 4
    %s71 = sld [smem:[#allocation3 + %s70]]
    %s72 = sld [smem:[#allocation4 + %s70]]
    %s73 = scvt.s32.f32 %s72
    %v74 = vstv %s71
    %vm75 = vcmp.eq.s32.totalorder %v25, %v74
    %vm76 = vmand %vm29, %vm75
    %v77 = vstv %s73
    %v78 = vsel %vm76, %v77, 0.0
    %v79 = vadd.f32 %v69, %v78
    %s80 = sadd.s32 %s30, 5
    %s81 = sld [smem:[#allocation3 + %s80]]
    %s82 = sld [smem:[#allocation4 + %s80]]
    %s83 = scvt.s32.f32 %s82
    %v84 = vstv %s81
    %vm85 = vcmp.eq.s32.totalorder %v25, %v84
    %vm86 = vmand %vm29, %vm85
    %v87 = vstv %s83
    %v88 = vsel %vm86, %v87, 0.0
    %v89 = vadd.f32 %v79, %v88
    %s90 = sadd.s32 %s30, 6
    %s91 = sld [smem:[#allocation3 + %s90]]
    %s92 = sld [smem:[#allocation4 + %s90]]
    %s93 = scvt.s32.f32 %s92
    %v94 = vstv %s91
    %vm95 = vcmp.eq.s32.totalorder %v25, %v94
    %vm96 = vmand %vm29, %vm95
    %v97 = vstv %s93
    %v98 = vsel %vm96, %v97, 0.0
    %v99 = vadd.f32 %v89, %v98
    %s100 = sadd.s32 %s30, 7
    %s101 = sld [smem:[#allocation3 + %s100]]
    %s102 = sld [smem:[#allocation4 + %s100]]
    %s103 = scvt.s32.f32 %s102
    %v104 = vstv %s101
    %vm105 = vcmp.eq.s32.totalorder %v25, %v104
    %vm106 = vmand %vm29, %vm105
    %v107 = vstv %s103
    %v108 = vsel %vm106, %v107, 0.0
    %v109 = vadd.f32 %v99, %v108
    %s110 = sadd.s32 %s28, 1
    %vm111 = vcmp.eq.s32.totalorder %v27, 1
    %s112 = smul.u32 %s110, 128
    %s113 = sld [smem:[#allocation3 + %s112]]
    %s114 = sld [smem:[#allocation4 + %s112]]
    %s115 = scvt.s32.f32 %s114
    %v116 = vstv %s113
    %vm117 = vcmp.eq.s32.totalorder %v25, %v116
    %vm118 = vmand %vm111, %vm117
    %v119 = vstv %s115
    %v120 = vsel %vm118, %v119, 0.0
    %v121 = vadd.f32 %v109, %v120
    %s122 = sadd.s32 %s112, 1
    %s123 = sld [smem:[#allocation3 + %s122]]
    %s124 = sld [smem:[#allocation4 + %s122]]
    %s125 = scvt.s32.f32 %s124
    %v126 = vstv %s123
    %vm127 = vcmp.eq.s32.totalorder %v25, %v126
    %vm128 = vmand %vm111, %vm127
    %v129 = vstv %s125
    %v130 = vsel %vm128, %v129, 0.0
    %v131 = vadd.f32 %v121, %v130
    %s132 = sadd.s32 %s112, 2
    %s133 = sld [smem:[#allocation3 + %s132]]
    %s134 = sld [smem:[#allocation4 + %s132]]
    %s135 = scvt.s32.f32 %s134
    %v136 = vstv %s133
    %vm137 = vcmp.eq.s32.totalorder %v25, %v136
    %vm138 = vmand %vm111, %vm137
    %v139 = vstv %s135
    %v140 = vsel %vm138, %v139, 0.0
    %v141 = vadd.f32 %v131, %v140
    %s142 = sadd.s32 %s112, 3
    %s143 = sld [smem:[#allocation3 + %s142]]
    %s144 = sld [smem:[#allocation4 + %s142]]
    %s145 = scvt.s32.f32 %s144
    %v146 = vstv %s143
    %vm147 = vcmp.eq.s32.totalorder %v25, %v146
    %vm148 = vmand %vm111, %vm147
    %v149 = vstv %s145
    %v150 = vsel %vm148, %v149, 0.0
    %v151 = vadd.f32 %v141, %v150
    %s152 = sadd.s32 %s112, 4
    %s153 = sld [smem:[#allocation3 + %s152]]
    %s154 = sld [smem:[#allocation4 + %s152]]
    %s155 = scvt.s32.f32 %s154
    %v156 = vstv %s153
    %vm157 = vcmp.eq.s32.totalorder %v25, %v156
    %vm158 = vmand %vm111, %vm157
    %v159 = vstv %s155
    %v160 = vsel %vm158, %v159, 0.0
    %v161 = vadd.f32 %v151, %v160
    %s162 = sadd.s32 %s112, 5
    %s163 = sld [smem:[#allocation3 + %s162]]
    %s164 = sld [smem:[#allocation4 + %s162]]
    %s165 = scvt.s32.f32 %s164
    %v166 = vstv %s163
    %vm167 = vcmp.eq.s32.totalorder %v25, %v166
    %vm168 = vmand %vm111, %vm167
    %v169 = vstv %s165
    %v170 = vsel %vm168, %v169, 0.0
    %v171 = vadd.f32 %v161, %v170
    %s172 = sadd.s32 %s112, 6
    %s173 = sld [smem:[#allocation3 + %s172]]
    %s174 = sld [smem:[#allocation4 + %s172]]
    %s175 = scvt.s32.f32 %s174
    %v176 = vstv %s173
    %vm177 = vcmp.eq.s32.totalorder %v25, %v176
    %vm178 = vmand %vm111, %vm177
    %v179 = vstv %s175
    %v180 = vsel %vm178, %v179, 0.0
    %v181 = vadd.f32 %v171, %v180
    %s182 = sadd.s32 %s112, 7
    %s183 = sld [smem:[#allocation3 + %s182]]
    %s184 = sld [smem:[#allocation4 + %s182]]
    %s185 = scvt.s32.f32 %s184
    %v186 = vstv %s183
    %vm187 = vcmp.eq.s32.totalorder %v25, %v186
    %vm188 = vmand %vm111, %vm187
    %v189 = vstv %s185
    %v190 = vsel %vm188, %v189, 0.0
    %v191 = vadd.f32 %v181, %v190
    %v192 = vld [vmem:[%s2] sm:$0xff]
    %v193 = vld [vmem:[%s2 + $0x8] sm:$0xff]
    %v194 = vld [vmem:[%s2 + $0x10] sm:$0xff]
    %v195 = vld [vmem:[%s2 + $0x18] sm:$0xff]
    %v196 = vld [vmem:[%s2 + $0x20] sm:$0xff]
    %v197 = vld [vmem:[%s2 + $0x28] sm:$0xff]
    %v198 = vld [vmem:[%s2 + $0x30] sm:$0xff]
    %v199 = vld [vmem:[%s2 + $0x38] sm:$0xff]
    %v200 = vld [vmem:[%s2 + $0x40] sm:$0xff]
    %v201 = vld [vmem:[%s2 + $0x48] sm:$0xff]
    %v202 = vld [vmem:[%s2 + $0x50] sm:$0xff]
    %v203 = vld [vmem:[%s2 + $0x58] sm:$0xff]
    %v204 = vld [vmem:[%s2 + $0x60] sm:$0xff]
    %v205 = vld [vmem:[%s2 + $0x68] sm:$0xff]
    %v206 = vld [vmem:[%s2 + $0x70] sm:$0xff]
    %v207 = vld [vmem:[%s2 + $0x78] sm:$0xff]
    %208 = vmatprep.subr.mxu0 0.0
    %209 = vmatpush1.msra.mxu0 %v207
    %210 = vmatprep.subr.mxu0 0.0
    %211 = vmatpush1.msra.mxu0 %v206
    %212 = vmatprep.subr.mxu0 0.0
    %213 = vmatpush1.msra.mxu0 %v205
    %214 = vmatprep.subr.mxu0 0.0
    %215 = vmatpush1.msra.mxu0 %v204
    %216 = vmatprep.subr.mxu0 0.0
    %217 = vmatpush1.msra.mxu0 %v203
    %218 = vmatprep.subr.mxu0 0.0
    %219 = vmatpush1.msra.mxu0 %v202
    %220 = vmatprep.subr.mxu0 0.0
    %221 = vmatpush1.msra.mxu0 %v201
    %222 = vmatprep.subr.mxu0 0.0
    %223 = vmatpush1.msra.mxu0 %v200
    %224 = vmatprep.subr.mxu0 0.0
    %225 = vmatpush1.msra.mxu0 %v199
    %226 = vmatprep.subr.mxu0 0.0
    %227 = vmatpush1.msra.mxu0 %v198
    %228 = vmatprep.subr.mxu0 0.0
    %229 = vmatpush1.msra.mxu0 %v197
    %230 = vmatprep.subr.mxu0 0.0
    %231 = vmatpush1.msra.mxu0 %v196
    %232 = vmatprep.subr.mxu0 0.0
    %233 = vmatpush1.msra.mxu0 %v195
    %234 = vmatprep.subr.mxu0 0.0
    %235 = vmatpush1.msra.mxu0 %v194
    %236 = vmatprep.subr.mxu0 0.0
    %237 = vmatpush1.msra.mxu0 %v193
    %238 = vmatprep.subr.mxu0 0.0
    %239 = vmatpush1.msra.mxu0 %v192
    %240 = vmatprep.subr.mxu0 0.0
    %241 = vmatpush2.msra.mxu0 0.0
    %242 = vmatprep.subr.mxu0 0.0
    %243 = vmatpush2.msra.mxu0 0.0
    %244 = vmatprep.subr.mxu0 0.0
    %245 = vmatpush2.msra.mxu0 0.0
    %246 = vmatprep.subr.mxu0 0.0
    %247 = vmatpush2.msra.mxu0 0.0
    %248 = vmatprep.subr.mxu0 0.0
    %249 = vmatpush2.msra.mxu0 0.0
    %250 = vmatprep.subr.mxu0 0.0
    %251 = vmatpush2.msra.mxu0 0.0
    %252 = vmatprep.subr.mxu0 0.0
    %253 = vmatpush2.msra.mxu0 0.0
    %254 = vmatprep.subr.mxu0 0.0
    %255 = vmatpush2.msra.mxu0 0.0
    %256 = vmatprep.subr.mxu0 0.0
    %257 = vmatpush2.msra.mxu0 0.0
    %258 = vmatprep.subr.mxu0 0.0
    %259 = vmatpush2.msra.mxu0 0.0
    %260 = vmatprep.subr.mxu0 0.0
    %261 = vmatpush2.msra.mxu0 0.0
    %262 = vmatprep.subr.mxu0 0.0
    %263 = vmatpush2.msra.mxu0 0.0
    %264 = vmatprep.subr.mxu0 0.0
    %265 = vmatpush2.msra.mxu0 0.0
    %266 = vmatprep.subr.mxu0 0.0
    %267 = vmatpush2.msra.mxu0 0.0
    %268 = vmatprep.subr.mxu0 0.0
    %269 = vmatpush2.msra.mxu0 0.0
    %270 = vmatprep.subr.mxu0 0.0
    %271 = vmatpush2.msra.mxu0 0.0
    %272 = vmatprep.mubr.f32.mxu0 0.0
    %273 = vmatmul.mubr.f32.gmra.mxu0 %v191
    %v274 = vpop.f32.mrf.mxu0
    %v275 = vadd.f32 0.0, %v274
    %v276 = vpop.f32.mrf.mxu0
    %277 = vdwg.mxu0
    %vm278 = vcmask 1041408
    %v279 = vsel %vm278, %v191, 0.0
    %280 = vadd.xlane.f32.xlu0 %v279
    %v281 = vpop.xlane.xlu0 %280
    %v282 = vmax.f32 %v281, 1e-09
    %v283 = vrcp.pop %v282
    %v284 = vmul.f32 %v275, %v283
    %v285 = vld [vmem:[%s3] sm:$0xff]
    %v286 = vld [vmem:[%s3 + $0x8] sm:$0xff]
    %v287 = vld [vmem:[%s3 + $0x10] sm:$0xff]
    %v288 = vld [vmem:[%s3 + $0x18] sm:$0xff]
    %vm289 = vcmask 261120
    %v291 = vsel %vm289, %v284, 0
    %293 = vmatprep.subr.mxu0 0.0
    %294 = vmatpush1.msra.mxu0 0.0
    %295 = vmatprep.subr.mxu0 0.0
    %296 = vmatpush1.msra.mxu0 0.0
    %297 = vmatprep.subr.mxu0 0.0
    %298 = vmatpush1.msra.mxu0 0.0
    %299 = vmatprep.subr.mxu0 0.0
    %300 = vmatpush1.msra.mxu0 0.0
    %301 = vmatprep.subr.mxu0 0.0
    %302 = vmatpush1.msra.mxu0 0.0
    %303 = vmatprep.subr.mxu0 0.0
    %304 = vmatpush1.msra.mxu0 0.0
    %305 = vmatprep.subr.mxu0 0.0
    %306 = vmatpush1.msra.mxu0 0.0
    %307 = vmatprep.subr.mxu0 0.0
    %308 = vmatpush1.msra.mxu0 0.0
    %309 = vmatprep.subr.mxu0 0.0
    %310 = vmatpush1.msra.mxu0 0.0
    %311 = vmatprep.subr.mxu0 0.0
    %312 = vmatpush1.msra.mxu0 0.0
    %313 = vmatprep.subr.mxu0 0.0
    %314 = vmatpush1.msra.mxu0 0.0
    %315 = vmatprep.subr.mxu0 0.0
    %316 = vmatpush1.msra.mxu0 0.0
    %317 = vmatprep.subr.mxu0 0.0
    %318 = vmatpush1.msra.mxu0 %v288
    %319 = vmatprep.subr.mxu0 0.0
    %320 = vmatpush1.msra.mxu0 %v287
    %321 = vmatprep.subr.mxu0 0.0
    %322 = vmatpush1.msra.mxu0 %v286
    %323 = vmatprep.subr.mxu0 0.0
    %324 = vmatpush1.msra.mxu0 %v285
    %325 = vmatprep.subr.mxu0 0.0
    %326 = vmatpush2.msra.mxu0 0.0
    %327 = vmatprep.subr.mxu0 0.0
    %328 = vmatpush2.msra.mxu0 0.0
    %329 = vmatprep.subr.mxu0 0.0
    %330 = vmatpush2.msra.mxu0 0.0
    %331 = vmatprep.subr.mxu0 0.0
    %332 = vmatpush2.msra.mxu0 0.0
    %333 = vmatprep.subr.mxu0 0.0
    %334 = vmatpush2.msra.mxu0 0.0
    %335 = vmatprep.subr.mxu0 0.0
    %336 = vmatpush2.msra.mxu0 0.0
    %337 = vmatprep.subr.mxu0 0.0
    %338 = vmatpush2.msra.mxu0 0.0
    %339 = vmatprep.subr.mxu0 0.0
    %340 = vmatpush2.msra.mxu0 0.0
    %341 = vmatprep.subr.mxu0 0.0
    %342 = vmatpush2.msra.mxu0 0.0
    %343 = vmatprep.subr.mxu0 0.0
    %344 = vmatpush2.msra.mxu0 0.0
    %345 = vmatprep.subr.mxu0 0.0
    %346 = vmatpush2.msra.mxu0 0.0
    %347 = vmatprep.subr.mxu0 0.0
    %348 = vmatpush2.msra.mxu0 0.0
    %349 = vmatprep.subr.mxu0 0.0
    %350 = vmatpush2.msra.mxu0 0.0
    %351 = vmatprep.subr.mxu0 0.0
    %352 = vmatpush2.msra.mxu0 0.0
    %353 = vmatprep.subr.mxu0 0.0
    %354 = vmatpush2.msra.mxu0 0.0
    %355 = vmatprep.subr.mxu0 0.0
    %356 = vmatpush2.msra.mxu0 0.0
    %357 = vmatprep.mubr.f32.mxu0 0.0
    %358 = vmatmul.mubr.f32.gmra.mxu0 %v291
    %v359 = vpop.f32.mrf.mxu0
    %v360 = vadd.f32 0.0, %v359
    %v361 = vpop.f32.mrf.mxu0
    %362 = vdwg.mxu0
    %363 = vst [vmem:[#allocation5] sm:$0x3] %v360
    // Predicated region
    $region10: #{tpu_custom_call.1} parent=1 // pred_check
      _
    $region11: #{tpu_custom_call.1} parent=1 // pred_check_branch
      %365 = sbr.rel (0) target = $region13
    $region12: #{tpu_custom_call.1} parent=1 // pred_region
      %s367 = ssub.s32 32, 32
      %368 = vsyncadd [#allocation6], %s367
      %s370 = sshll.u32 [#allocation5], 4
      %s371 = int_to_ptr.vmem [resolvable:$true] %s370
      %373 = dma.vmem_to_hbm [thread:$0]  %s371, 32, %s4, [#allocation6]
    $region13: #{tpu_custom_call.1} parent=1 // pred_fallthru
      _
    // Predicated region
    $region14: #{tpu_custom_call.1} parent=1 // pred_check
      _
    $region15: #{tpu_custom_call.1} parent=1 // pred_check_branch
      %375 = sbr.rel (0) target = $region17
    $region16: #{tpu_custom_call.1} parent=1 // pred_region
      %376 = dma.done [#allocation6], 32
    $region17: #{tpu_custom_call.1} parent=1 // pred_fallthru
      _
    %377 = vsyncpa [#allocation6], 1

</llo_original>
